<compile_context>
chip_gen: v7x
topology: tpu7x:2x2x1
jax: 0.10.0
libtpu: 0.0.40
codegen_flags: <defaults>
</compile_context>

<pallas_src>
import functools

import jax
import jax.numpy as jnp
from jax.experimental import pallas as pl
from jax.experimental.pallas import tpu as pltpu

_TARGET_BLOCK_BYTES = 2 * 1024 * 1024      # per streamed x tile (double-buffered)
_SINGLE_PASS_MAX_BYTES = 8 * 1024 * 1024   # x fully resident (conservative for v7x/v5e)
_VMEM_LIMIT_BYTES = 48 * 1024 * 1024       # > v5e's 16 MiB default, < v7x's 64 MiB physical


# --------------------------------------------------------------------------
# Kernels
# --------------------------------------------------------------------------
def _fused_kernel(x_ref, w1t_ref, w2t_ref, o_ref, *, inv_hw):
    """Single pass: x resident in VMEM. x: (B, C, HW)."""
    y = jnp.sum(x_ref[...].astype(jnp.float32), axis=-1) * inv_hw           # (B, C)
    h = jnp.maximum(jnp.dot(y, w1t_ref[...],
                            preferred_element_type=jnp.float32), 0.0)       # (B, C//r)
    g = jax.nn.sigmoid(jnp.dot(h, w2t_ref[...],
                               preferred_element_type=jnp.float32))         # (B, C)
    o_ref[...] = (x_ref[...] * g.astype(o_ref.dtype)[:, :, None]).astype(o_ref.dtype)


def _pool_excite_kernel(x_ref, w1t_ref, w2t_ref, gate_ref, *, inv_hw):
    """Streamed global-average-pool + excitation.

    gate_ref (f32, (B, C)) is the output with a constant block index across the
    whole reduction grid, so it stays resident in VMEM (accumulator pattern)
    and is flushed to HBM exactly once at the end.
    """
    t = pl.program_id(0)

    @pl.when(t == 0)
    def _init():
        gate_ref[...] = jnp.zeros_like(gate_ref)

    # x tile: (B, C, thw) -> per-channel partial sum over the lane axis.
    gate_ref[...] += jnp.sum(x_ref[...].astype(jnp.float32), axis=-1)

    @pl.when(t == pl.num_programs(0) - 1)
    def _excite():
        y = gate_ref[...] * inv_hw                                           # mean
        h = jnp.maximum(jnp.dot(y, w1t_ref[...],
                                preferred_element_type=jnp.float32), 0.0)
        gate_ref[...] = jax.nn.sigmoid(jnp.dot(h, w2t_ref[...],
                                               preferred_element_type=jnp.float32))


def _scale_kernel(x_ref, gate_ref, o_ref):
    """Streamed broadcast multiply: o = x * gate[:, :, None]."""
    gate = gate_ref[...].astype(o_ref.dtype)                                 # (B, C)
    o_ref[...] = (x_ref[...] * gate[:, :, None]).astype(o_ref.dtype)


# --------------------------------------------------------------------------
# Tiling helpers
# --------------------------------------------------------------------------
def _spatial_tile_cols(hw, batch, channels, itemsize, block_bytes):
    """Pick a lane-tile width (multiple of 128) and the padded HW extent.

    Returns (thw, hw_padded).  thw * batch * channels * itemsize ~<= block_bytes
    (with a 128-lane floor).  If hw has no aligned divisor, hw is padded up so
    that hw_padded % thw == 0 (the wrapper zero-pads; zeros don't affect sums).
    """
    cap = block_bytes // max(1, batch * channels * itemsize)
    cap = max(128, (cap // 128) * 128)
    if hw <= cap:
        return hw, hw                          # one full-extent tile (always legal)
    t = cap
    while t >= 128:
        if hw % t == 0:
            return t, hw                       # exact multiple-of-128 divisor
        t -= 128
    hw_pad = ((hw + cap - 1) // cap) * cap     # no divisor: pad the lane axis
    return cap, hw_pad


# --------------------------------------------------------------------------
# Public wrapper
# --------------------------------------------------------------------------
def se_block(x_nchw, w1, w2, *, block_bytes=_TARGET_BLOCK_BYTES, force_streaming=False):
    """SE_Block.forward.  x: (B, C, H, W); w1: (C//r, C); w2: (C, C//r)."""
    B, C, H, W = x_nchw.shape
    HW = H * W
    x = x_nchw.reshape(B, C, HW)                       # free bitcast, native layout
    w1t = jnp.asarray(w1, jnp.float32).T               # (C, C//r)
    w2t = jnp.asarray(w2, jnp.float32).T               # (C//r, C)
    cr = w1t.shape[1]
    inv_hw = 1.0 / float(HW)

    x_bytes = B * C * HW * x.dtype.itemsize

    # ---- small-activation path: whole tensor resident, 1 read + 1 write ----
    if (not force_streaming) and x_bytes <= _SINGLE_PASS_MAX_BYTES:
        out = pl.pallas_call(
            functools.partial(_fused_kernel, inv_hw=inv_hw),
            out_shape=jax.ShapeDtypeStruct((B, C, HW), x.dtype),
            compiler_params=pltpu.CompilerParams(
                vmem_limit_bytes=_VMEM_LIMIT_BYTES),
        )(x, w1t, w2t)
        return out.reshape(B, C, H, W)

    # ---- streaming path: pool+excite, then a parallel scale pass -----------
    thw, hw_pad = _spatial_tile_cols(HW, B, C, x.dtype.itemsize, block_bytes)
    if hw_pad != HW:
        # zero padding: contributes nothing to the channel sums (mean divides
        # by the true HW) and the padded output columns are sliced off below.
        x = jnp.pad(x, ((0, 0), (0, 0), (0, hw_pad - HW)))
    n_tiles = hw_pad // thw

    gate = pl.pallas_call(
        functools.partial(_pool_excite_kernel, inv_hw=inv_hw),
        out_shape=jax.ShapeDtypeStruct((B, C), jnp.float32),
        grid=(n_tiles,),
        in_specs=[
            pl.BlockSpec((B, C, thw), lambda t: (0, 0, t)),
            pl.BlockSpec((C, cr), lambda t: (0, 0)),   # resident, DMA'd once
            pl.BlockSpec((cr, C), lambda t: (0, 0)),   # resident, DMA'd once
        ],
        out_specs=pl.BlockSpec((B, C), lambda t: (0, 0)),   # accumulator, 1 flush
        compiler_params=pltpu.CompilerParams(
            dimension_semantics=("arbitrary",),
            vmem_limit_bytes=_VMEM_LIMIT_BYTES),
    )(x, w1t, w2t)

    out = pl.pallas_call(
        _scale_kernel,
        out_shape=jax.ShapeDtypeStruct((B, C, hw_pad), x.dtype),
        grid=(n_tiles,),
        in_specs=[
            pl.BlockSpec((B, C, thw), lambda t: (0, 0, t)),
            pl.BlockSpec((B, C), lambda t: (0, 0)),    # tiny gate, resident
        ],
        out_specs=pl.BlockSpec((B, C, thw), lambda t: (0, 0, t)),
        compiler_params=pltpu.CompilerParams(
            dimension_semantics=("parallel",),         # sharded across TCs on v7x
            vmem_limit_bytes=_VMEM_LIMIT_BYTES),
    )(x, gate)

    if hw_pad != HW:
        out = out[:, :, :HW]
    return out.reshape(B, C, H, W)


# --------------------------------------------------------------------------
# Self-test
# --------------------------------------------------------------------------
if __name__ == "__main__":
    key = jax.random.PRNGKey(0)
    B, C, H, W, r = 2, 64, 16, 16, 8
    kx, k1, k2 = jax.random.split(key, 3)
    x = jax.random.normal(kx, (B, C, H, W), jnp.float32)
    w1 = 0.1 * jax.random.normal(k1, (C // r, C), jnp.float32)  # Linear(c, c//r, bias=False)
    w2 = 0.1 * jax.random.normal(k2, (C, C // r), jnp.float32)  # Linear(c//r, c, bias=False)

    def ref_fn(xv, w1v, w2v):
        y = jnp.mean(xv, axis=(2, 3))
        g = jax.nn.sigmoid(jnp.maximum(y @ w1v.T, 0.0) @ w2v.T)
        return xv * g[:, :, None, None]

    # Path 1: fused single-pass kernel (x resident in VMEM).
    out1 = jax.block_until_ready(jax.jit(se_block)(x, w1, w2))
    ref1 = ref_fn(x, w1, w2)
    assert out1.shape == x.shape, (out1.shape, x.shape)
    assert bool(jnp.all(jnp.isfinite(out1)))
    assert bool(jnp.allclose(out1, ref1, rtol=1e-4, atol=1e-4)), \
        float(jnp.max(jnp.abs(out1 - ref1)))

    # Path 2: streaming two-call path with small lane tiles (exercises tiling).
    stream_fn = jax.jit(functools.partial(se_block, force_streaming=True,
                                          block_bytes=64 * 1024))
    out2 = jax.block_until_ready(stream_fn(x, w1, w2))
    assert bool(jnp.allclose(out2, ref1, rtol=1e-4, atol=1e-4)), \
        float(jnp.max(jnp.abs(out2 - ref1)))

    # Path 3: streaming on a non-128-aligned spatial size (exercises padding).
    x3 = jax.random.normal(kx, (B, C, 15, 15), jnp.float32)
    ref3 = ref_fn(x3, w1, w2)
    out3 = jax.block_until_ready(stream_fn(x3, w1, w2))
    assert out3.shape == x3.shape
    assert bool(jnp.allclose(out3, ref3, rtol=1e-4, atol=1e-4)), \
        float(jnp.max(jnp.abs(out3 - ref3)))

    print("KERNEL_OK")
</pallas_src>

<mosaic_0001>
module attributes {stable_mosaic.version = 11 : i64} {
  func.func @_fused_kernel(%arg0: memref<2x64x256xf32, #tpu.memory_space<vmem>>, %arg1: memref<64x8xf32, #tpu.memory_space<vmem>>, %arg2: memref<8x64xf32, #tpu.memory_space<vmem>>, %arg3: memref<2x64x256xf32, #tpu.memory_space<vmem>>) attributes {dimension_semantics = [], scalar_prefetch = 0 : i64, scratch_operands = 0 : i64, tpu.core_type = #tpu.core_type<tc>} {
    %c0 = arith.constant 0 : index
    %c0_0 = arith.constant 0 : index
    %c0_1 = arith.constant 0 : index
    %0 = vector.load %arg0[%c0, %c0_0, %c0_1] : memref<2x64x256xf32, #tpu.memory_space<vmem>>, vector<2x64x256xf32>
    %cst = arith.constant dense<0.000000e+00> : vector<2x64xf32>
    %1 = vector.multi_reduction <add>, %0, %cst [2] : vector<2x64x256xf32> to vector<2x64xf32>
    %cst_2 = arith.constant 3.906250e-03 : f32
    %2 = vector.broadcast %cst_2 : f32 to vector<2x64xf32>
    %3 = arith.mulf %1, %2 : vector<2x64xf32>
    %c0_3 = arith.constant 0 : index
    %c0_4 = arith.constant 0 : index
    %4 = vector.load %arg1[%c0_3, %c0_4] : memref<64x8xf32, #tpu.memory_space<vmem>>, vector<64x8xf32>
    %cst_5 = arith.constant dense<0.000000e+00> : vector<2x8xf32>
    %5 = tpu.matmul %3, %4, %cst_5 {dimension_numbers = #tpu.dot_dimension_numbers<[1], [0], [0], [1], [0, 0, 1, 1], [], []>} : vector<2x64xf32>, vector<64x8xf32>, vector<2x8xf32> -> vector<2x8xf32>
    %cst_6 = arith.constant 0.000000e+00 : f32
    %6 = vector.broadcast %cst_6 : f32 to vector<2x8xf32>
    %7 = arith.maximumf %5, %6 : vector<2x8xf32>
    %c0_7 = arith.constant 0 : index
    %c0_8 = arith.constant 0 : index
    %8 = vector.load %arg2[%c0_7, %c0_8] : memref<8x64xf32, #tpu.memory_space<vmem>>, vector<8x64xf32>
    %cst_9 = arith.constant dense<0.000000e+00> : vector<2x64xf32>
    %9 = tpu.matmul %7, %8, %cst_9 {dimension_numbers = #tpu.dot_dimension_numbers<[1], [0], [0], [1], [0, 0, 1, 1], [], []>} : vector<2x8xf32>, vector<8x64xf32>, vector<2x64xf32> -> vector<2x64xf32>
    %10 = arith.negf %9 : vector<2x64xf32>
    %11 = math.exp %10 : vector<2x64xf32>
    %cst_10 = arith.constant 1.000000e+00 : f32
    %12 = vector.broadcast %cst_10 : f32 to vector<2x64xf32>
    %13 = arith.addf %12, %11 : vector<2x64xf32>
    %14 = arith.divf %12, %13 : vector<2x64xf32>
    %c0_11 = arith.constant 0 : index
    %c0_12 = arith.constant 0 : index
    %c0_13 = arith.constant 0 : index
    %15 = vector.load %arg0[%c0_11, %c0_12, %c0_13] : memref<2x64x256xf32, #tpu.memory_space<vmem>>, vector<2x64x256xf32>
    %16 = vector.shape_cast %14 : vector<2x64xf32> to vector<2x64x1xf32>
    %17 = vector.broadcast %16 : vector<2x64x1xf32> to vector<2x64x256xf32>
    %18 = arith.mulf %15, %17 : vector<2x64x256xf32>
    %c0_14 = arith.constant 0 : index
    %c0_15 = arith.constant 0 : index
    %c0_16 = arith.constant 0 : index
    %19 = vector.load %arg3[%c0_14, %c0_15, %c0_16] : memref<2x64x256xf32, #tpu.memory_space<vmem>>, vector<2x64x256xf32>
    tpu.vector_store %arg3[%c0_14, %c0_15, %c0_16], %18 {strides = array<i32>} : memref<2x64x256xf32, #tpu.memory_space<vmem>>, vector<2x64x256xf32>,
    return
  }
}

</mosaic_0001>

<llo_original>
// kernel: se_block.1
$region0: #{se_block.1}
  #allocation0 [shape = 'u32[]', space=smem, size = 0x4, offset = 0x4, fixed_abs, tag = 'smem constant byte address 0x4 - core index']
  #allocation1 [shape = 'u32[144,128]{1,0:T(1,128)}', space=vmem, size = 0x12000, scoped, tag = 'internal scratch']
  %s0 = inlined_call_operand.vmem [shape: f32[2,64,256], index: 0, kind: input, shape index: {}]
  %s1 = inlined_call_operand.vmem [shape: f32[64,8], index: 1, kind: input, shape index: {}]
  %s2 = inlined_call_operand.vmem [shape: f32[8,64], index: 2, kind: input, shape index: {}]
  %s3 = inlined_call_operand.vmem [shape: f32[2,64,256], index: 3, kind: output, shape index: {}]
  %s4 = sld [smem:[#allocation0]]
  $region22: #{se_block.1} parent=0
    _
  %s6 = ssub.s32 1, %s4
  %s7 = scalar_select 0, %s6, %s4
  // Predicated region
  $region2: #{se_block.1} parent=0 // pred_check
    _
  $region3: #{se_block.1} parent=0 // pred_check_branch
    %9 = sbr.rel (0) target = $region5
  $region4: #{se_block.1} parent=0 // pred_region
    _
  $region5: #{se_block.1} parent=0 // pred_fallthru
    _
  // Predicated region
  $region6: #{se_block.1} parent=0 // pred_check
    _
  $region7: #{se_block.1} parent=0 // pred_check_branch
    %11 = sbr.rel (0) target = $region9
  $region8: #{se_block.1} parent=0 // pred_region
    _
  $region9: #{se_block.1} parent=0 // pred_fallthru
    _
  // Predicated region
  $region10: #{se_block.1} parent=0 // pred_check
    _
  $region11: #{se_block.1} parent=0 // pred_check_branch
    %13 = sbr.rel (0) target = $region13
  $region12: #{se_block.1} parent=0 // pred_region
    _
  $region13: #{se_block.1} parent=0 // pred_fallthru
    _
  %v14 = vld [vmem:[%s0] sm:$0xff]
  %v15 = vld [vmem:[%s0 + $0x8] sm:$0xff]
  %v16 = vld [vmem:[%s0 + $0x10] sm:$0xff]
  %v17 = vld [vmem:[%s0 + $0x18] sm:$0xff]
  %v18 = vld [vmem:[%s0 + $0x20] sm:$0xff]
  %v19 = vld [vmem:[%s0 + $0x28] sm:$0xff]
  %v20 = vld [vmem:[%s0 + $0x30] sm:$0xff]
  %v21 = vld [vmem:[%s0 + $0x38] sm:$0xff]
  %v22 = vld [vmem:[%s0 + $0x40] sm:$0xff]
  %v23 = vld [vmem:[%s0 + $0x48] sm:$0xff]
  %v24 = vld [vmem:[%s0 + $0x50] sm:$0xff]
  %v25 = vld [vmem:[%s0 + $0x58] sm:$0xff]
  %v26 = vld [vmem:[%s0 + $0x60] sm:$0xff]
  %v27 = vld [vmem:[%s0 + $0x68] sm:$0xff]
  %v28 = vld [vmem:[%s0 + $0x70] sm:$0xff]
  %v29 = vld [vmem:[%s0 + $0x78] sm:$0xff]
  %v30 = vld [vmem:[%s0 + $0x80] sm:$0xff]
  %v31 = vld [vmem:[%s0 + $0x88] sm:$0xff]
  %v32 = vld [vmem:[%s0 + $0x90] sm:$0xff]
  %v33 = vld [vmem:[%s0 + $0x98] sm:$0xff]
  %v34 = vld [vmem:[%s0 + $0xa0] sm:$0xff]
  %v35 = vld [vmem:[%s0 + $0xa8] sm:$0xff]
  %v36 = vld [vmem:[%s0 + $0xb0] sm:$0xff]
  %v37 = vld [vmem:[%s0 + $0xb8] sm:$0xff]
  %v38 = vld [vmem:[%s0 + $0xc0] sm:$0xff]
  %v39 = vld [vmem:[%s0 + $0xc8] sm:$0xff]
  %v40 = vld [vmem:[%s0 + $0xd0] sm:$0xff]
  %v41 = vld [vmem:[%s0 + $0xd8] sm:$0xff]
  %v42 = vld [vmem:[%s0 + $0xe0] sm:$0xff]
  %v43 = vld [vmem:[%s0 + $0xe8] sm:$0xff]
  %v44 = vld [vmem:[%s0 + $0xf0] sm:$0xff]
  %v45 = vld [vmem:[%s0 + $0xf8] sm:$0xff]
  %v46 = vadd.f32 %v14, %v15
  %47 = vadd.xlane.f32.xlu0 %v46
  %v48 = vpop.xlane.xlu0 %47
  %v49 = vadd.f32 %v16, %v17
  %50 = vadd.xlane.f32.xlu0 %v49
  %v51 = vpop.xlane.xlu0 %50
  %v52 = vadd.f32 %v18, %v19
  %53 = vadd.xlane.f32.xlu0 %v52
  %v54 = vpop.xlane.xlu0 %53
  %v55 = vadd.f32 %v20, %v21
  %56 = vadd.xlane.f32.xlu0 %v55
  %v57 = vpop.xlane.xlu0 %56
  %v58 = vadd.f32 %v22, %v23
  %59 = vadd.xlane.f32.xlu0 %v58
  %v60 = vpop.xlane.xlu0 %59
  %v61 = vadd.f32 %v24, %v25
  %62 = vadd.xlane.f32.xlu0 %v61
  %v63 = vpop.xlane.xlu0 %62
  %v64 = vadd.f32 %v26, %v27
  %65 = vadd.xlane.f32.xlu0 %v64
  %v66 = vpop.xlane.xlu0 %65
  %v67 = vadd.f32 %v28, %v29
  %68 = vadd.xlane.f32.xlu0 %v67
  %v69 = vpop.xlane.xlu0 %68
  %v70 = vadd.f32 %v30, %v31
  %71 = vadd.xlane.f32.xlu0 %v70
  %v72 = vpop.xlane.xlu0 %71
  %v73 = vadd.f32 %v32, %v33
  %74 = vadd.xlane.f32.xlu0 %v73
  %v75 = vpop.xlane.xlu0 %74
  %v76 = vadd.f32 %v34, %v35
  %77 = vadd.xlane.f32.xlu0 %v76
  %v78 = vpop.xlane.xlu0 %77
  %v79 = vadd.f32 %v36, %v37
  %80 = vadd.xlane.f32.xlu0 %v79
  %v81 = vpop.xlane.xlu0 %80
  %v82 = vadd.f32 %v38, %v39
  %83 = vadd.xlane.f32.xlu0 %v82
  %v84 = vpop.xlane.xlu0 %83
  %v85 = vadd.f32 %v40, %v41
  %86 = vadd.xlane.f32.xlu0 %v85
  %v87 = vpop.xlane.xlu0 %86
  %v88 = vadd.f32 %v42, %v43
  %89 = vadd.xlane.f32.xlu0 %v88
  %v90 = vpop.xlane.xlu0 %89
  %v91 = vadd.f32 %v44, %v45
  %92 = vadd.xlane.f32.xlu0 %v91
  %v93 = vpop.xlane.xlu0 %92
  %v94 = vmul.f32 %v48, 0.00390625
  %v95 = vmul.f32 %v51, 0.00390625
  %v96 = vmul.f32 %v54, 0.00390625
  %v97 = vmul.f32 %v57, 0.00390625
  %v98 = vmul.f32 %v60, 0.00390625
  %v99 = vmul.f32 %v63, 0.00390625
  %v100 = vmul.f32 %v66, 0.00390625
  %v101 = vmul.f32 %v69, 0.00390625
  %v102 = vmul.f32 %v72, 0.00390625
  %v103 = vmul.f32 %v75, 0.00390625
  %v104 = vmul.f32 %v78, 0.00390625
  %v105 = vmul.f32 %v81, 0.00390625
  %v106 = vmul.f32 %v84, 0.00390625
  %v107 = vmul.f32 %v87, 0.00390625
  %v108 = vmul.f32 %v90, 0.00390625
  %v109 = vmul.f32 %v93, 0.00390625
  %v110 = vld [vmem:[%s1] sm:$0xff]
  %v111 = vld [vmem:[%s1 + $0x8] sm:$0xff]
  %v112 = vld [vmem:[%s1 + $0x10] sm:$0xff]
  %v113 = vld [vmem:[%s1 + $0x18] sm:$0xff]
  %v114 = vld [vmem:[%s1 + $0x20] sm:$0xff]
  %v115 = vld [vmem:[%s1 + $0x28] sm:$0xff]
  %v116 = vld [vmem:[%s1 + $0x30] sm:$0xff]
  %v117 = vld [vmem:[%s1 + $0x38] sm:$0xff]
  %v134 = vlaneseq
  %v135 = vand.u32 %v134, 127
  %v136 = vlaneseq
  %v137 = vshrl.u32 %v136, 7
  %v138 = vsub.s32 %v135, %v137
  %v139 = vrot.slane %v94, %v138
  %v140 = vadd.s32 %v135, 4294967288
  %v141 = vlaneseq
  %v142 = vshrl.u32 %v141, 7
  %v143 = vsub.s32 %v140, %v142
  %v144 = vrot.slane %v95, %v143
  %vm145 = vcmask 130112
  %v146 = vsel %vm145, %v144, %v139
  %v147 = vadd.s32 %v135, 4294967280
  %v148 = vlaneseq
  %v149 = vshrl.u32 %v148, 7
  %v150 = vsub.s32 %v147, %v149
  %v151 = vrot.slane %v96, %v150
  %vm152 = vcmask 195712
  %v153 = vsel %vm152, %v151, %v146
  %v154 = vadd.s32 %v135, 4294967272
  %v155 = vlaneseq
  %v156 = vshrl.u32 %v155, 7
  %v157 = vsub.s32 %v154, %v156
  %v158 = vrot.slane %v97, %v157
  %vm159 = vcmask 261312
  %v160 = vsel %vm159, %v158, %v153
  %v161 = vadd.s32 %v135, 4294967264
  %v162 = vlaneseq
  %v163 = vshrl.u32 %v162, 7
  %v164 = vsub.s32 %v161, %v163
  %v165 = vrot.slane %v98, %v164
  %vm166 = vcmask 326912
  %v167 = vsel %vm166, %v165, %v160
  %v168 = vadd.s32 %v135, 4294967256
  %v169 = vlaneseq
  %v170 = vshrl.u32 %v169, 7
  %v171 = vsub.s32 %v168, %v170
  %v172 = vrot.slane %v99, %v171
  %vm173 = vcmask 392512
  %v174 = vsel %vm173, %v172, %v167
  %v175 = vadd.s32 %v135, 4294967248
  %v176 = vlaneseq
  %v177 = vshrl.u32 %v176, 7
  %v178 = vsub.s32 %v175, %v177
  %v179 = vrot.slane %v100, %v178
  %vm180 = vcmask 458112
  %v181 = vsel %vm180, %v179, %v174
  %v182 = vadd.s32 %v135, 4294967240
  %v183 = vlaneseq
  %v184 = vshrl.u32 %v183, 7
  %v185 = vsub.s32 %v182, %v184
  %v186 = vrot.slane %v101, %v185
  %vm187 = vcmask 523712
  %v188 = vsel %vm187, %v186, %v181
  %v189 = vlaneseq
  %v190 = vshrl.u32 %v189, 7
  %v191 = vsub.s32 %v135, %v190
  %v192 = vrot.slane %v102, %v191
  %v193 = vlaneseq
  %v194 = vshrl.u32 %v193, 7
  %v195 = vsub.s32 %v140, %v194
  %v196 = vrot.slane %v103, %v195
  %v197 = vsel %vm145, %v196, %v192
  %v198 = vlaneseq
  %v199 = vshrl.u32 %v198, 7
  %v200 = vsub.s32 %v147, %v199
  %v201 = vrot.slane %v104, %v200
  %v202 = vsel %vm152, %v201, %v197
  %v203 = vlaneseq
  %v204 = vshrl.u32 %v203, 7
  %v205 = vsub.s32 %v154, %v204
  %v206 = vrot.slane %v105, %v205
  %v207 = vsel %vm159, %v206, %v202
  %v208 = vlaneseq
  %v209 = vshrl.u32 %v208, 7
  %v210 = vsub.s32 %v161, %v209
  %v211 = vrot.slane %v106, %v210
  %v212 = vsel %vm166, %v211, %v207
  %v213 = vlaneseq
  %v214 = vshrl.u32 %v213, 7
  %v215 = vsub.s32 %v168, %v214
  %v216 = vrot.slane %v107, %v215
  %v217 = vsel %vm173, %v216, %v212
  %v218 = vlaneseq
  %v219 = vshrl.u32 %v218, 7
  %v220 = vsub.s32 %v175, %v219
  %v221 = vrot.slane %v108, %v220
  %v222 = vsel %vm180, %v221, %v217
  %v223 = vlaneseq
  %v224 = vshrl.u32 %v223, 7
  %v225 = vsub.s32 %v182, %v224
  %v226 = vrot.slane %v109, %v225
  %v227 = vsel %vm187, %v226, %v222
  %vm228 = vcmask 1041409
  %v229 = vsel %vm228, %v227, %v188
  %vm230 = vcmask 523264
  %v231 = vsel %vm230, %v229, 0
  %233 = vmatprep.subr.mxu0 0.0
  %234 = vmatpush1.msra.mxu0 %v110
  %235 = vmatprep.subr.mxu0 0.0
  %236 = vmatpush1.msra.mxu0 %v111
  %237 = vmatprep.subr.mxu0 0.0
  %238 = vmatpush1.msra.mxu0 %v112
  %239 = vmatprep.subr.mxu0 0.0
  %240 = vmatpush1.msra.mxu0 %v113
  %241 = vmatprep.subr.mxu0 0.0
  %242 = vmatpush1.msra.mxu0 %v114
  %243 = vmatprep.subr.mxu0 0.0
  %244 = vmatpush1.msra.mxu0 %v115
  %245 = vmatprep.subr.mxu0 0.0
  %246 = vmatpush1.msra.mxu0 %v116
  %247 = vmatprep.subr.mxu0 0.0
  %248 = vmatpush1.msra.mxu0 %v117
  %249 = vmatprep.subr.mxu0 0.0
  %250 = vmatpush1.msra.mxu0 0.0
  %251 = vmatprep.subr.mxu0 0.0
  %252 = vmatpush1.msra.mxu0 0.0
  %253 = vmatprep.subr.mxu0 0.0
  %254 = vmatpush1.msra.mxu0 0.0
  %255 = vmatprep.subr.mxu0 0.0
  %256 = vmatpush1.msra.mxu0 0.0
  %257 = vmatprep.subr.mxu0 0.0
  %258 = vmatpush1.msra.mxu0 0.0
  %259 = vmatprep.subr.mxu0 0.0
  %260 = vmatpush1.msra.mxu0 0.0
  %261 = vmatprep.subr.mxu0 0.0
  %262 = vmatpush1.msra.mxu0 0.0
  %263 = vmatprep.subr.mxu0 0.0
  %264 = vmatpush1.msra.mxu0 0.0
  %265 = vmatprep.subr.mxu0 0.0
  %266 = vmatpush1.msra.mxu0 0.0
  %267 = vmatprep.subr.mxu0 0.0
  %268 = vmatpush1.msra.mxu0 0.0
  %269 = vmatprep.subr.mxu0 0.0
  %270 = vmatpush1.msra.mxu0 0.0
  %271 = vmatprep.subr.mxu0 0.0
  %272 = vmatpush1.msra.mxu0 0.0
  %273 = vmatprep.subr.mxu0 0.0
  %274 = vmatpush1.msra.mxu0 0.0
  %275 = vmatprep.subr.mxu0 0.0
  %276 = vmatpush1.msra.mxu0 0.0
  %277 = vmatprep.subr.mxu0 0.0
  %278 = vmatpush1.msra.mxu0 0.0
  %279 = vmatprep.subr.mxu0 0.0
  %280 = vmatpush1.msra.mxu0 0.0
  %281 = vmatprep.subr.mxu0 0.0
  %282 = vmatpush1.msra.mxu0 0.0
  %283 = vmatprep.subr.mxu0 0.0
  %284 = vmatpush1.msra.mxu0 0.0
  %285 = vmatprep.subr.mxu0 0.0
  %286 = vmatpush1.msra.mxu0 0.0
  %287 = vmatprep.subr.mxu0 0.0
  %288 = vmatpush1.msra.mxu0 0.0
  %289 = vmatprep.subr.mxu0 0.0
  %290 = vmatpush1.msra.mxu0 0.0
  %291 = vmatprep.subr.mxu0 0.0
  %292 = vmatpush1.msra.mxu0 0.0
  %293 = vmatprep.subr.mxu0 0.0
  %294 = vmatpush1.msra.mxu0 0.0
  %295 = vmatprep.subr.mxu0 0.0
  %296 = vmatpush1.msra.mxu0 0.0
  %297 = vmatprep.mubr.f32.mxu0 0.0
  %298 = vmatmul.mubr.f32.gmra.mrb[0].mxu0 %v231
  %v299 = vpop.f32.mrb[0].mxu0
  %v300 = vadd.f32 0.0, %v299
  %v301 = vpop.f32.mrb[0].mxu0
  %302 = vdwg.mxu0
  %v303 = vmax.f32 %v300, 0.0
  %v304 = vld [vmem:[%s2] sm:$0xff]
  %vm305 = vcmask 64512
  %v307 = vsel %vm305, %v303, 0
  %309 = vmatprep.subr.mxu0 0.0
  %310 = vmatpush1.msra.mxu0 %v304
  %311 = vmatprep.subr.mxu0 0.0
  %312 = vmatpush1.msra.mxu0 0.0
  %313 = vmatprep.subr.mxu0 0.0
  %314 = vmatpush1.msra.mxu0 0.0
  %315 = vmatprep.subr.mxu0 0.0
  %316 = vmatpush1.msra.mxu0 0.0
  %317 = vmatprep.subr.mxu0 0.0
  %318 = vmatpush1.msra.mxu0 0.0
  %319 = vmatprep.subr.mxu0 0.0
  %320 = vmatpush1.msra.mxu0 0.0
  %321 = vmatprep.subr.mxu0 0.0
  %322 = vmatpush1.msra.mxu0 0.0
  %323 = vmatprep.subr.mxu0 0.0
  %324 = vmatpush1.msra.mxu0 0.0
  %325 = vmatprep.subr.mxu0 0.0
  %326 = vmatpush1.msra.mxu0 0.0
  %327 = vmatprep.subr.mxu0 0.0
  %328 = vmatpush1.msra.mxu0 0.0
  %329 = vmatprep.subr.mxu0 0.0
  %330 = vmatpush1.msra.mxu0 0.0
  %331 = vmatprep.subr.mxu0 0.0
  %332 = vmatpush1.msra.mxu0 0.0
  %333 = vmatprep.subr.mxu0 0.0
  %334 = vmatpush1.msra.mxu0 0.0
  %335 = vmatprep.subr.mxu0 0.0
  %336 = vmatpush1.msra.mxu0 0.0
  %337 = vmatprep.subr.mxu0 0.0
  %338 = vmatpush1.msra.mxu0 0.0
  %339 = vmatprep.subr.mxu0 0.0
  %340 = vmatpush1.msra.mxu0 0.0
  %341 = vmatprep.subr.mxu0 0.0
  %342 = vmatpush1.msra.mxu0 0.0
  %343 = vmatprep.subr.mxu0 0.0
  %344 = vmatpush1.msra.mxu0 0.0
  %345 = vmatprep.subr.mxu0 0.0
  %346 = vmatpush1.msra.mxu0 0.0
  %347 = vmatprep.subr.mxu0 0.0
  %348 = vmatpush1.msra.mxu0 0.0
  %349 = vmatprep.subr.mxu0 0.0
  %350 = vmatpush1.msra.mxu0 0.0
  %351 = vmatprep.subr.mxu0 0.0
  %352 = vmatpush1.msra.mxu0 0.0
  %353 = vmatprep.subr.mxu0 0.0
  %354 = vmatpush1.msra.mxu0 0.0
  %355 = vmatprep.subr.mxu0 0.0
  %356 = vmatpush1.msra.mxu0 0.0
  %357 = vmatprep.subr.mxu0 0.0
  %358 = vmatpush1.msra.mxu0 0.0
  %359 = vmatprep.subr.mxu0 0.0
  %360 = vmatpush1.msra.mxu0 0.0
  %361 = vmatprep.subr.mxu0 0.0
  %362 = vmatpush1.msra.mxu0 0.0
  %363 = vmatprep.subr.mxu0 0.0
  %364 = vmatpush1.msra.mxu0 0.0
  %365 = vmatprep.subr.mxu0 0.0
  %366 = vmatpush1.msra.mxu0 0.0
  %367 = vmatprep.subr.mxu0 0.0
  %368 = vmatpush1.msra.mxu0 0.0
  %369 = vmatprep.subr.mxu0 0.0
  %370 = vmatpush1.msra.mxu0 0.0
  %371 = vmatprep.subr.mxu0 0.0
  %372 = vmatpush1.msra.mxu0 0.0
  %373 = vmatprep.mubr.f32.mxu0 0.0
  %374 = vmatmul.mubr.f32.gmra.mrb[0].mxu0 %v307
  %v375 = vpop.f32.mrb[0].mxu0
  %v376 = vadd.f32 0.0, %v375
  %v377 = vpop.f32.mrb[0].mxu0
  %378 = vdwg.mxu0
  %v379 = vxor.u32 %v376, 2147483648
  %v380 = vmul.f32 %v379, 1.442695
  %v381 = vpow.pop %v380
  %v382 = vadd.f32 %v381, 1.0
  %v383 = vrcp.pop %v382
  %v384 = vmul.f32 1.0, %v383
  %v385 = vlaneseq
  %v386 = vshrl.u32 %v385, 7
  %v387 = vsub.s32 0, %v386
  %v388 = vrot.slane %v384, %v387
  %390 = vbcast.lane.b32.xlu0 %v388, 256
  %v391 = vpop.permute.xlu0 %390
  %s393 = sor.u32 256, 8
  %394 = vbcast.lane.b32.xlu0 %v388, %s393
  %v395 = vpop.permute.xlu0 %394
  %s397 = sor.u32 256, 16
  %398 = vbcast.lane.b32.xlu0 %v388, %s397
  %v399 = vpop.permute.xlu0 %398
  %s401 = sor.u32 256, 24
  %402 = vbcast.lane.b32.xlu0 %v388, %s401
  %v403 = vpop.permute.xlu0 %402
  %s405 = sor.u32 256, 32
  %406 = vbcast.lane.b32.xlu0 %v388, %s405
  %v407 = vpop.permute.xlu0 %406
  %s409 = sor.u32 256, 40
  %410 = vbcast.lane.b32.xlu0 %v388, %s409
  %v411 = vpop.permute.xlu0 %410
  %s413 = sor.u32 256, 48
  %414 = vbcast.lane.b32.xlu0 %v388, %s413
  %v415 = vpop.permute.xlu0 %414
  %s417 = sor.u32 256, 56
  %418 = vbcast.lane.b32.xlu0 %v388, %s417
  %v419 = vpop.permute.xlu0 %418
  %v420 = vlaneseq
  %v421 = vshrl.u32 %v420, 7
  %v422 = vsub.s32 1, %v421
  %v423 = vrot.slane %v384, %v422
  %425 = vbcast.lane.b32.xlu0 %v423, 256
  %v426 = vpop.permute.xlu0 %425
  %s428 = sor.u32 256, 8
  %429 = vbcast.lane.b32.xlu0 %v423, %s428
  %v430 = vpop.permute.xlu0 %429
  %s432 = sor.u32 256, 16
  %433 = vbcast.lane.b32.xlu0 %v423, %s432
  %v434 = vpop.permute.xlu0 %433
  %s436 = sor.u32 256, 24
  %437 = vbcast.lane.b32.xlu0 %v423, %s436
  %v438 = vpop.permute.xlu0 %437
  %s440 = sor.u32 256, 32
  %441 = vbcast.lane.b32.xlu0 %v423, %s440
  %v442 = vpop.permute.xlu0 %441
  %s444 = sor.u32 256, 40
  %445 = vbcast.lane.b32.xlu0 %v423, %s444
  %v446 = vpop.permute.xlu0 %445
  %s448 = sor.u32 256, 48
  %449 = vbcast.lane.b32.xlu0 %v423, %s448
  %v450 = vpop.permute.xlu0 %449
  %s452 = sor.u32 256, 56
  %453 = vbcast.lane.b32.xlu0 %v423, %s452
  %v454 = vpop.permute.xlu0 %453
  %v455 = vmul.f32 %v14, %v391
  %v456 = vmul.f32 %v15, %v391
  %v457 = vmul.f32 %v16, %v395
  %v458 = vmul.f32 %v17, %v395
  %v459 = vmul.f32 %v18, %v399
  %v460 = vmul.f32 %v19, %v399
  %v461 = vmul.f32 %v20, %v403
  %v462 = vmul.f32 %v21, %v403
  %v463 = vmul.f32 %v22, %v407
  %v464 = vmul.f32 %v23, %v407
  %v465 = vmul.f32 %v24, %v411
  %v466 = vmul.f32 %v25, %v411
  %v467 = vmul.f32 %v26, %v415
  %v468 = vmul.f32 %v27, %v415
  %v469 = vmul.f32 %v28, %v419
  %v470 = vmul.f32 %v29, %v419
  %v471 = vmul.f32 %v30, %v426
  %v472 = vmul.f32 %v31, %v426
  %v473 = vmul.f32 %v32, %v430
  %v474 = vmul.f32 %v33, %v430
  %v475 = vmul.f32 %v34, %v434
  %v476 = vmul.f32 %v35, %v434
  %v477 = vmul.f32 %v36, %v438
  %v478 = vmul.f32 %v37, %v438
  %v479 = vmul.f32 %v38, %v442
  %v480 = vmul.f32 %v39, %v442
  %v481 = vmul.f32 %v40, %v446
  %v482 = vmul.f32 %v41, %v446
  %v483 = vmul.f32 %v42, %v450
  %v484 = vmul.f32 %v43, %v450
  %v485 = vmul.f32 %v44, %v454
  %v486 = vmul.f32 %v45, %v454
  %487 = vst [vmem:[%s3] sm:$0xff] %v455
  %488 = vst [vmem:[%s3 + $0x8] sm:$0xff] %v456
  %489 = vst [vmem:[%s3 + $0x10] sm:$0xff] %v457
  %490 = vst [vmem:[%s3 + $0x18] sm:$0xff] %v458
  %491 = vst [vmem:[%s3 + $0x20] sm:$0xff] %v459
  %492 = vst [vmem:[%s3 + $0x28] sm:$0xff] %v460
  %493 = vst [vmem:[%s3 + $0x30] sm:$0xff] %v461
  %494 = vst [vmem:[%s3 + $0x38] sm:$0xff] %v462
  %495 = vst [vmem:[%s3 + $0x40] sm:$0xff] %v463
  %496 = vst [vmem:[%s3 + $0x48] sm:$0xff] %v464
  %497 = vst [vmem:[%s3 + $0x50] sm:$0xff] %v465
  %498 = vst [vmem:[%s3 + $0x58] sm:$0xff] %v466
  %499 = vst [vmem:[%s3 + $0x60] sm:$0xff] %v467
  %500 = vst [vmem:[%s3 + $0x68] sm:$0xff] %v468
  %501 = vst [vmem:[%s3 + $0x70] sm:$0xff] %v469
  %502 = vst [vmem:[%s3 + $0x78] sm:$0xff] %v470
  %503 = vst [vmem:[%s3 + $0x80] sm:$0xff] %v471
  %504 = vst [vmem:[%s3 + $0x88] sm:$0xff] %v472
  %505 = vst [vmem:[%s3 + $0x90] sm:$0xff] %v473
  %506 = vst [vmem:[%s3 + $0x98] sm:$0xff] %v474
  %507 = vst [vmem:[%s3 + $0xa0] sm:$0xff] %v475
  %508 = vst [vmem:[%s3 + $0xa8] sm:$0xff] %v476
  %509 = vst [vmem:[%s3 + $0xb0] sm:$0xff] %v477
  %510 = vst [vmem:[%s3 + $0xb8] sm:$0xff] %v478
  %511 = vst [vmem:[%s3 + $0xc0] sm:$0xff] %v479
  %512 = vst [vmem:[%s3 + $0xc8] sm:$0xff] %v480
  %513 = vst [vmem:[%s3 + $0xd0] sm:$0xff] %v481
  %514 = vst [vmem:[%s3 + $0xd8] sm:$0xff] %v482
  %515 = vst [vmem:[%s3 + $0xe0] sm:$0xff] %v483
  %516 = vst [vmem:[%s3 + $0xe8] sm:$0xff] %v484
  %517 = vst [vmem:[%s3 + $0xf0] sm:$0xff] %v485
  %518 = vst [vmem:[%s3 + $0xf8] sm:$0xff] %v486
  // Predicated region
  $region14: #{se_block.1} parent=0 // pred_check
    _
  $region15: #{se_block.1} parent=0 // pred_check_branch
    %520 = sbr.rel (0) target = $region17
  $region16: #{se_block.1} parent=0 // pred_region
    _
  $region17: #{se_block.1} parent=0 // pred_fallthru
    _
  // Predicated region
  $region18: #{se_block.1} parent=0 // pred_check
    _
  $region19: #{se_block.1} parent=0 // pred_check_branch
    %522 = sbr.rel (0) target = $region21
  $region20: #{se_block.1} parent=0 // pred_region
    _
  $region21: #{se_block.1} parent=0 // pred_fallthru
    _

</llo_original>
